<compile_context>
chip_gen: v5e
topology: v5e:2x2
jax: 0.10.0
libtpu: 0.0.40
codegen_flags: <defaults>
</compile_context>

<pallas_src>
import functools
import math

import numpy as np
import jax
import jax.numpy as jnp
from jax import lax
from jax.experimental import pallas as pl
from jax.experimental.pallas import tpu as pltpu


# ---------------------------------------------------------------------------
# Single fused kernel: QKV proj -> split -> attention -> concat -> W_o
# ---------------------------------------------------------------------------

def _fused_attention_kernel(heads, x_ref, wqkv_ref, bqkv_ref, wf_ref, bf_ref,
                            out_ref):
    B, F = x_ref.shape
    hs = F // heads

    # Fused Q/K/V projection: one (B, 3F) MXU matmul.  The split_heads column
    # permutation and the 1/sqrt(F) score scale are baked into wqkv/bqkv.
    qkv = jnp.dot(x_ref[...], wqkv_ref[...],
                  preferred_element_type=jnp.float32) + bqkv_ref[...]

    # Regroup to the split layout (heads*B, hs) fully in registers.
    # (These hs-wide lane slices are NOT tile-aligned; they lower to masked
    #  selects / lane shifts on otherwise idle VPU/XLU slots.)
    q_s = jnp.concatenate(
        [qkv[:, h * hs:(h + 1) * hs] for h in range(heads)], axis=0)
    k_s = jnp.concatenate(
        [qkv[:, F + h * hs:F + (h + 1) * hs] for h in range(heads)], axis=0)
    v_s = jnp.concatenate(
        [qkv[:, 2 * F + h * hs:2 * F + (h + 1) * hs] for h in range(heads)],
        axis=0)

    # scores = (Q * scale) @ K^T — transpose expressed via contraction dims.
    scores = lax.dot_general(
        q_s, k_s, dimension_numbers=(((1,), (1,)), ((), ())),
        preferred_element_type=jnp.float32)

    # Numerically-stable softmax with an exact divide (accuracy > slot savings
    # here; nothing in this kernel is EUP-bound).
    m = jnp.max(scores, axis=-1, keepdims=True)
    p = jnp.exp(scores - m)
    w = p / jnp.sum(p, axis=-1, keepdims=True)

    att = jnp.dot(w, v_s, preferred_element_type=jnp.float32)   # (heads*B, hs)

    # Undo the row regrouping back to a (B, F) slab, still in registers.
    a_resh = jnp.concatenate(
        [att[h * B:(h + 1) * B, :] for h in range(heads)], axis=1)   # (B, F)

    # ONE fused matmul produces [attended_values | outputs] as a single slab:
    # wf = [concat-perm matrix | W_o(row-permuted)], bf = [0 | b_o].
    out_ref[...] = jnp.dot(a_resh, wf_ref[...],
                           preferred_element_type=jnp.float32) + bf_ref[...]


# ---------------------------------------------------------------------------
# Host-side one-time weight "baking"
# ---------------------------------------------------------------------------

def bake_params(wq, bq, wk, bk, wv, bv, wo, bo, heads):
    """Fold split/concat permutations, score scale and W_o fusion into weights."""
    F = wq.shape[0]
    O = wo.shape[1]
    hs = F // heads
    scale = 1.0 / math.sqrt(float(F))          # module scales by sqrt(input_size)

    j = np.arange(F)
    sp = (j % heads) * hs + (j // heads)       # sp[s*heads + h] = h*hs + s
    sp_inv = np.argsort(sp)                    # inverse permutation

    # Fused QKV weights with split permutation (and scale on Q) baked in.
    w_qkv = jnp.concatenate([wq[:, sp] * scale, wk[:, sp], wv[:, sp]], axis=1)
    b_qkv = jnp.concatenate([bq[sp] * scale, bk[sp], bv[sp]]).reshape(1, 3 * F)

    # Fused output matrix: a_resh @ [P | wo_p] = [attended_values | A_cat @ W_o]
    perm_mat = jnp.eye(F, dtype=jnp.float32)[:, sp]          # a_resh @ P = A_cat
    wo_p = wo[sp_inv, :]                                      # a_resh @ wo_p = A_cat @ W_o
    w_fused = jnp.concatenate([perm_mat, wo_p], axis=1)       # (F, F + O)
    b_fused = jnp.concatenate(
        [jnp.zeros((F,), jnp.float32), bo]).reshape(1, F + O)
    return w_qkv, b_qkv, w_fused, b_fused


# ---------------------------------------------------------------------------
# pallas_call wrapper
# ---------------------------------------------------------------------------

def self_attention_forward(x, w_qkv, b_qkv, w_fused, b_fused, heads):
    B, F = x.shape
    FO = w_fused.shape[1]
    BH, hs = B * heads, F // heads

    cost = pl.CostEstimate(
        flops=2 * (B * F * 3 * F + BH * hs * BH + BH * BH * hs + B * F * FO),
        transcendentals=BH * BH,
        bytes_accessed=4 * (x.size + w_qkv.size + b_qkv.size + w_fused.size
                            + b_fused.size + B * FO))

    vmem = pltpu.MemorySpace.VMEM
    slab = pl.pallas_call(
        functools.partial(_fused_attention_kernel, heads),
        out_shape=jax.ShapeDtypeStruct((B, FO), jnp.float32),
        in_specs=[pl.BlockSpec(memory_space=vmem) for _ in range(5)],
        out_specs=pl.BlockSpec(memory_space=vmem),
        cost_estimate=cost,
    )(x, w_qkv, b_qkv, w_fused, b_fused)

    attended_values = slab[:, :F]
    outputs = slab[:, F:]
    return outputs, attended_values


def make_self_attention_layer(wq, bq, wk, bk, wv, bv, wo, bo, attention_heads):
    """Bake weights ONCE and return a jitted forward(x) -> (outputs, attended)."""
    baked = bake_params(wq, bq, wk, bk, wv, bv, wo, bo, attention_heads)

    @jax.jit
    def forward(x):
        return self_attention_forward(x, *baked, heads=attention_heads)

    return forward


# ---------------------------------------------------------------------------
# Pure-JAX reference of the ORIGINAL module semantics (un-baked weights)
# ---------------------------------------------------------------------------

def _ref_forward(x, wq, bq, wk, bk, wv, bv, wo, bo, heads):
    F = x.shape[1]
    hs = F // heads

    def split(t):
        B = t.shape[0]
        return t.reshape(B, heads, hs).transpose(0, 2, 1).reshape(B * heads, hs)

    def concat(t):
        BH = t.shape[0]
        B = BH // heads
        return t.reshape(B, heads, hs).transpose(0, 2, 1).reshape(B, heads * hs)

    Q = x @ wq + bq
    K = x @ wk + bk
    V = x @ wv + bv
    Qs, Ks, Vs = split(Q), split(K), split(V)
    scores = (Qs @ Ks.T) / jnp.sqrt(jnp.float32(F))
    w = jax.nn.softmax(scores, axis=-1)
    att = concat(w @ Vs)
    return att @ wo + bo, att


if __name__ == "__main__":
    batch, input_size, output_size, heads = 8, 32, 16, 4

    key = jax.random.PRNGKey(0)
    ks = jax.random.split(key, 9)

    def init_linear(kw, kb, fan_in, fan_out):
        bound = 1.0 / math.sqrt(fan_in)
        w = jax.random.uniform(kw, (fan_in, fan_out), jnp.float32, -bound, bound)
        b = jax.random.uniform(kb, (fan_out,), jnp.float32, -bound, bound)
        return w, b

    wq, bq = init_linear(ks[0], ks[1], input_size, input_size)
    wk, bk = init_linear(ks[2], ks[3], input_size, input_size)
    wv, bv = init_linear(ks[4], ks[5], input_size, input_size)
    wo, bo = init_linear(ks[6], ks[7], input_size, output_size)
    x = jax.random.normal(ks[8], (batch, input_size), jnp.float32)

    forward = make_self_attention_layer(wq, bq, wk, bk, wv, bv, wo, bo, heads)
    outputs, attended = forward(x)
    outputs = jax.block_until_ready(outputs)
    attended = jax.block_until_ready(attended)

    ref_out, ref_att = _ref_forward(x, wq, bq, wk, bk, wv, bv, wo, bo, heads)
    assert outputs.shape == (batch, output_size)
    assert attended.shape == (batch, input_size)
    # Tolerance covers possible default-precision MXU passes on real hardware
    # (both the kernel and the XLA reference matmuls are subject to it).
    assert jnp.allclose(outputs, ref_out, atol=2e-3, rtol=2e-3), \
        float(jnp.max(jnp.abs(outputs - ref_out)))
    assert jnp.allclose(attended, ref_att, atol=2e-3, rtol=2e-3), \
        float(jnp.max(jnp.abs(attended - ref_att)))

    print("KERNEL_OK")
</pallas_src>

<mosaic_0001>
module attributes {stable_mosaic.version = 11 : i64} {
  func.func @_fused_attention_kernel(%arg0: memref<8x32xf32, #tpu.memory_space<vmem>>, %arg1: memref<32x96xf32, #tpu.memory_space<vmem>>, %arg2: memref<1x96xf32, #tpu.memory_space<vmem>>, %arg3: memref<32x48xf32, #tpu.memory_space<vmem>>, %arg4: memref<1x48xf32, #tpu.memory_space<vmem>>, %arg5: memref<8x48xf32, #tpu.memory_space<vmem>>) attributes {dimension_semantics = [], scalar_prefetch = 0 : i64, scratch_operands = 0 : i64, tpu.core_type = #tpu.core_type<tc>} {
    %c0 = arith.constant 0 : index
    %c0_0 = arith.constant 0 : index
    %0 = vector.load %arg0[%c0, %c0_0] : memref<8x32xf32, #tpu.memory_space<vmem>>, vector<8x32xf32>
    %c0_1 = arith.constant 0 : index
    %c0_2 = arith.constant 0 : index
    %1 = vector.load %arg1[%c0_1, %c0_2] : memref<32x96xf32, #tpu.memory_space<vmem>>, vector<32x96xf32>
    %cst = arith.constant dense<0.000000e+00> : vector<8x96xf32>
    %2 = tpu.matmul %0, %1, %cst {dimension_numbers = #tpu.dot_dimension_numbers<[1], [0], [0], [1], [0, 0, 1, 1], [], []>} : vector<8x32xf32>, vector<32x96xf32>, vector<8x96xf32> -> vector<8x96xf32>
    %c0_3 = arith.constant 0 : index
    %c0_4 = arith.constant 0 : index
    %3 = vector.load %arg2[%c0_3, %c0_4] : memref<1x96xf32, #tpu.memory_space<vmem>>, vector<1x96xf32>
    %4 = vector.broadcast %3 : vector<1x96xf32> to vector<8x96xf32>
    %5 = arith.addf %2, %4 : vector<8x96xf32>
    %6 = vector.extract_strided_slice %5 {offsets = [0, 0], sizes = [8, 8], strides = [1, 1]} : vector<8x96xf32> to vector<8x8xf32>
    %7 = vector.extract_strided_slice %5 {offsets = [0, 8], sizes = [8, 8], strides = [1, 1]} : vector<8x96xf32> to vector<8x8xf32>
    %8 = vector.extract_strided_slice %5 {offsets = [0, 16], sizes = [8, 8], strides = [1, 1]} : vector<8x96xf32> to vector<8x8xf32>
    %9 = vector.extract_strided_slice %5 {offsets = [0, 24], sizes = [8, 8], strides = [1, 1]} : vector<8x96xf32> to vector<8x8xf32>
    %10 = tpu.concatenate %6, %7, %8, %9 in 0 : vector<8x8xf32>, vector<8x8xf32>, vector<8x8xf32>, vector<8x8xf32> -> vector<32x8xf32>
    %11 = vector.extract_strided_slice %5 {offsets = [0, 32], sizes = [8, 8], strides = [1, 1]} : vector<8x96xf32> to vector<8x8xf32>
    %12 = vector.extract_strided_slice %5 {offsets = [0, 40], sizes = [8, 8], strides = [1, 1]} : vector<8x96xf32> to vector<8x8xf32>
    %13 = vector.extract_strided_slice %5 {offsets = [0, 48], sizes = [8, 8], strides = [1, 1]} : vector<8x96xf32> to vector<8x8xf32>
    %14 = vector.extract_strided_slice %5 {offsets = [0, 56], sizes = [8, 8], strides = [1, 1]} : vector<8x96xf32> to vector<8x8xf32>
    %15 = tpu.concatenate %11, %12, %13, %14 in 0 : vector<8x8xf32>, vector<8x8xf32>, vector<8x8xf32>, vector<8x8xf32> -> vector<32x8xf32>
    %16 = vector.extract_strided_slice %5 {offsets = [0, 64], sizes = [8, 8], strides = [1, 1]} : vector<8x96xf32> to vector<8x8xf32>
    %17 = vector.extract_strided_slice %5 {offsets = [0, 72], sizes = [8, 8], strides = [1, 1]} : vector<8x96xf32> to vector<8x8xf32>
    %18 = vector.extract_strided_slice %5 {offsets = [0, 80], sizes = [8, 8], strides = [1, 1]} : vector<8x96xf32> to vector<8x8xf32>
    %19 = vector.extract_strided_slice %5 {offsets = [0, 88], sizes = [8, 8], strides = [1, 1]} : vector<8x96xf32> to vector<8x8xf32>
    %20 = tpu.concatenate %16, %17, %18, %19 in 0 : vector<8x8xf32>, vector<8x8xf32>, vector<8x8xf32>, vector<8x8xf32> -> vector<32x8xf32>
    %cst_5 = arith.constant dense<0.000000e+00> : vector<32x32xf32>
    %21 = tpu.matmul %10, %15, %cst_5 {dimension_numbers = #tpu.dot_dimension_numbers<[1], [1], [0], [0], [0, 0, 1, 0], [], []>} : vector<32x8xf32>, vector<32x8xf32>, vector<32x32xf32> -> vector<32x32xf32>
    %cst_6 = arith.constant dense<0xFF800000> : vector<32xf32>
    %22 = vector.multi_reduction <maximumf>, %21, %cst_6 [1] : vector<32x32xf32> to vector<32xf32>
    %23 = vector.shape_cast %22 : vector<32xf32> to vector<32x1xf32>
    %24 = vector.broadcast %23 : vector<32x1xf32> to vector<32x32xf32>
    %25 = arith.subf %21, %24 : vector<32x32xf32>
    %26 = math.exp %25 : vector<32x32xf32>
    %cst_7 = arith.constant dense<0.000000e+00> : vector<32xf32>
    %27 = vector.multi_reduction <add>, %26, %cst_7 [1] : vector<32x32xf32> to vector<32xf32>
    %28 = vector.shape_cast %27 : vector<32xf32> to vector<32x1xf32>
    %29 = vector.broadcast %28 : vector<32x1xf32> to vector<32x32xf32>
    %30 = arith.divf %26, %29 : vector<32x32xf32>
    %cst_8 = arith.constant dense<0.000000e+00> : vector<32x8xf32>
    %31 = tpu.matmul %30, %20, %cst_8 {dimension_numbers = #tpu.dot_dimension_numbers<[1], [0], [0], [1], [0, 0, 1, 1], [], []>} : vector<32x32xf32>, vector<32x8xf32>, vector<32x8xf32> -> vector<32x8xf32>
    %32 = vector.extract_strided_slice %31 {offsets = [0, 0], sizes = [8, 8], strides = [1, 1]} : vector<32x8xf32> to vector<8x8xf32>
    %33 = vector.extract_strided_slice %31 {offsets = [8, 0], sizes = [8, 8], strides = [1, 1]} : vector<32x8xf32> to vector<8x8xf32>
    %34 = vector.extract_strided_slice %31 {offsets = [16, 0], sizes = [8, 8], strides = [1, 1]} : vector<32x8xf32> to vector<8x8xf32>
    %35 = vector.extract_strided_slice %31 {offsets = [24, 0], sizes = [8, 8], strides = [1, 1]} : vector<32x8xf32> to vector<8x8xf32>
    %36 = tpu.concatenate %32, %33, %34, %35 in 1 : vector<8x8xf32>, vector<8x8xf32>, vector<8x8xf32>, vector<8x8xf32> -> vector<8x32xf32>
    %c0_9 = arith.constant 0 : index
    %c0_10 = arith.constant 0 : index
    %37 = vector.load %arg3[%c0_9, %c0_10] : memref<32x48xf32, #tpu.memory_space<vmem>>, vector<32x48xf32>
    %cst_11 = arith.constant dense<0.000000e+00> : vector<8x48xf32>
    %38 = tpu.matmul %36, %37, %cst_11 {dimension_numbers = #tpu.dot_dimension_numbers<[1], [0], [0], [1], [0, 0, 1, 1], [], []>} : vector<8x32xf32>, vector<32x48xf32>, vector<8x48xf32> -> vector<8x48xf32>
    %c0_12 = arith.constant 0 : index
    %c0_13 = arith.constant 0 : index
    %39 = vector.load %arg4[%c0_12, %c0_13] : memref<1x48xf32, #tpu.memory_space<vmem>>, vector<1x48xf32>
    %40 = vector.broadcast %39 : vector<1x48xf32> to vector<8x48xf32>
    %41 = arith.addf %38, %40 : vector<8x48xf32>
    %c0_14 = arith.constant 0 : index
    %c0_15 = arith.constant 0 : index
    %42 = vector.load %arg5[%c0_14, %c0_15] : memref<8x48xf32, #tpu.memory_space<vmem>>, vector<8x48xf32>
    tpu.vector_store %arg5[%c0_14, %c0_15], %41 {strides = array<i32>} : memref<8x48xf32, #tpu.memory_space<vmem>>, vector<8x48xf32>,
    return
  }
}

</mosaic_0001>

<llo_original>
// kernel: forward.1
$region0: #{forward.1}
  #allocation0 [shape = 'u32[]', space=smem, size = 0x4, offset = 0x4, fixed_abs, tag = 'smem constant byte address 0x4 - core index']
  #allocation1 [shape = 'u32[72,128]{1,0:T(1,128)}', space=vmem, size = 0x9000, scoped, tag = 'internal scratch']
  %s0 = inlined_call_operand.hbm [shape: f32[8,32], index: 0, kind: input, shape index: {}]
  %s1 = inlined_call_operand.hbm [shape: f32[32,96], index: 1, kind: input, shape index: {}]
  %s2 = inlined_call_operand.hbm [shape: f32[1,96], index: 2, kind: input, shape index: {}]
  %s3 = inlined_call_operand.hbm [shape: f32[32,48], index: 3, kind: input, shape index: {}]
  %s4 = inlined_call_operand.vmem [shape: f32[1,48], index: 4, kind: input, shape index: {}]
  %s5 = inlined_call_operand.vmem [shape: f32[8,48], index: 5, kind: output, shape index: {}]
  %s6 = sld [smem:[#allocation0]]
  $region46: #{forward.1} parent=0
    _
  %s8 = ssub.s32 1, %s6
  %s9 = scalar_select 0, %s8, %s6
  $region1: #{forward.1} parent=0
    #allocation2 [shape = 'u8[4096]{0}', space=vmem, size = 0x1000, scoped, tag = 'input window, operand 0, single buffered']
    #allocation3 [shape = 's32[1]{0}', space=sflag, size = 0x4, scoped, tag = 'scoped memory for forward.1']
    #allocation4 [shape = 'u8[16384]{0}', space=vmem, size = 0x4000, scoped, tag = 'input window, operand 1, single buffered']
    #allocation5 [shape = 's32[1]{0}', space=sflag, size = 0x4, scoped, tag = 'scoped memory for forward.1']
    #allocation6 [shape = 'u8[512]{0}', space=vmem, size = 0x400, scoped, tag = 'input window, operand 2, single buffered']
    #allocation7 [shape = 'u8[16384]{0}', space=vmem, size = 0x4000, scoped, tag = 'input window, operand 3, single buffered']
    #allocation8 [shape = 's32[1]{0}', space=sflag, size = 0x4, scoped, tag = 'scoped memory for forward.1']
    %10 = vsyncpa [#allocation3], 0
    %11 = vsyncpa [#allocation5], 0
    %12 = vsyncpa [#allocation8], 0
    // Predicated region
    $region2: #{forward.1} parent=1 // pred_check
      _
    $region3: #{forward.1} parent=1 // pred_check_branch
      %14 = sbr.rel (0) target = $region5
    $region4: #{forward.1} parent=1 // pred_region
      %16 = vsyncadd [#allocation3], 0
      %s18 = sshll.u32 %s0, 4
      %s19 = int_to_ptr.hbm [resolvable:$true] %s18
      %s20 = sshll.u32 [#allocation2], 4
      %s21 = int_to_ptr.vmem [resolvable:$true] %s20
      %23 = dma.hbm_to_vmem [thread:$0]  %s19, 128, %s21, [#allocation3]
    $region5: #{forward.1} parent=1 // pred_fallthru
      _
    // Predicated region
    $region6: #{forward.1} parent=1 // pred_check
      _
    $region7: #{forward.1} parent=1 // pred_check_branch
      %25 = sbr.rel (0) target = $region9
    $region8: #{forward.1} parent=1 // pred_region
      %27 = vsyncadd [#allocation5], 0
      %s28 = sshll.u32 %s1, 4
      %s29 = int_to_ptr.hbm [resolvable:$true] %s28
      %s30 = sshll.u32 [#allocation4], 4
      %s31 = int_to_ptr.vmem [resolvable:$true] %s30
      %36 = dma.hbm_to_vmem [thread:$0]  %s29, 512, %s31, [#allocation5], 128, 128, 8
    $region9: #{forward.1} parent=1 // pred_fallthru
      _
    // Predicated region
    $region10: #{forward.1} parent=1 // pred_check
      _
    $region11: #{forward.1} parent=1 // pred_check_branch
      %38 = sbr.rel (0) target = $region13
    $region12: #{forward.1} parent=1 // pred_region
      %40 = vsyncadd [#allocation5], 0
      %s42 = sshll.u32 %s2, 4
      %s43 = int_to_ptr.hbm [resolvable:$true] %s42
      %s44 = sshll.u32 [#allocation6], 4
      %s45 = int_to_ptr.vmem [resolvable:$true] %s44
      %47 = dma.hbm_to_vmem [thread:$0]  %s43, 16, %s45, [#allocation5]
    $region13: #{forward.1} parent=1 // pred_fallthru
      _
    // Predicated region
    $region14: #{forward.1} parent=1 // pred_check
      _
    $region15: #{forward.1} parent=1 // pred_check_branch
      %49 = sbr.rel (0) target = $region17
    $region16: #{forward.1} parent=1 // pred_region
      %51 = vsyncadd [#allocation8], 0
      %s52 = sshll.u32 %s3, 4
      %s53 = int_to_ptr.hbm [resolvable:$true] %s52
      %s54 = sshll.u32 [#allocation7], 4
      %s55 = int_to_ptr.vmem [resolvable:$true] %s54
      %60 = dma.hbm_to_vmem [thread:$0]  %s53, 512, %s55, [#allocation8], 128, 128, 8
    $region17: #{forward.1} parent=1 // pred_fallthru
      _
    // Predicated region
    $region18: #{forward.1} parent=1 // pred_check
      _
    $region19: #{forward.1} parent=1 // pred_check_branch
      %62 = sbr.rel (0) target = $region21
    $region20: #{forward.1} parent=1 // pred_region
      _
    $region21: #{forward.1} parent=1 // pred_fallthru
      _
    // Predicated region
    $region22: #{forward.1} parent=1 // pred_check
      _
    $region23: #{forward.1} parent=1 // pred_check_branch
      %64 = sbr.rel (0) target = $region25
    $region24: #{forward.1} parent=1 // pred_region
      %66 = dma.done [#allocation3], 128
    $region25: #{forward.1} parent=1 // pred_fallthru
      _
    // Predicated region
    $region26: #{forward.1} parent=1 // pred_check
      _
    $region27: #{forward.1} parent=1 // pred_check_branch
      %68 = sbr.rel (0) target = $region29
    $region28: #{forward.1} parent=1 // pred_region
      %70 = dma.done [#allocation5], 512
    $region29: #{forward.1} parent=1 // pred_fallthru
      _
    // Predicated region
    $region30: #{forward.1} parent=1 // pred_check
      _
    $region31: #{forward.1} parent=1 // pred_check_branch
      %72 = sbr.rel (0) target = $region33
    $region32: #{forward.1} parent=1 // pred_region
      %74 = dma.done [#allocation5], 16
    $region33: #{forward.1} parent=1 // pred_fallthru
      _
    // Predicated region
    $region34: #{forward.1} parent=1 // pred_check
      _
    $region35: #{forward.1} parent=1 // pred_check_branch
      %76 = sbr.rel (0) target = $region37
    $region36: #{forward.1} parent=1 // pred_region
      %78 = dma.done [#allocation8], 512
    $region37: #{forward.1} parent=1 // pred_fallthru
      _
    %v79 = vld [vmem:[#allocation2] sm:$0xff]
    %v80 = vld [vmem:[#allocation4] sm:$0xff]
    %v81 = vld [vmem:[#allocation4 + $0x8] sm:$0xff]
    %v82 = vld [vmem:[#allocation4 + $0x10] sm:$0xff]
    %v83 = vld [vmem:[#allocation4 + $0x18] sm:$0xff]
    %v84 = vld [vmem:[#allocation6] sm:$0x1]
    %v86 = vperm.slane %v84, 0
    %vm88 = vcmask 261120
    %v90 = vsel %vm88, %v79, 0
    %92 = vmatpush.msra.mxu0 0.0
    %93 = vmatpush.msra.mxu0 0.0
    %94 = vmatpush.msra.mxu0 0.0
    %95 = vmatpush.msra.mxu0 0.0
    %96 = vmatpush.msra.mxu0 0.0
    %97 = vmatpush.msra.mxu0 0.0
    %98 = vmatpush.msra.mxu0 0.0
    %99 = vmatpush.msra.mxu0 0.0
    %100 = vmatpush.msra.mxu0 0.0
    %101 = vmatpush.msra.mxu0 0.0
    %102 = vmatpush.msra.mxu0 0.0
    %103 = vmatpush.msra.mxu0 0.0
    %104 = vmatpush.msra.mxu0 %v83
    %105 = vmatpush.msra.mxu0 %v82
    %106 = vmatpush.msra.mxu0 %v81
    %107 = vmatpush.msra.mxu0 %v80
    %108 = vmatmul.f32.gmra.mxu0 %v90
    %v109 = vpop.f32.mrf.mxu0
    %v110 = vadd.f32 %v86, %v109
    %111 = vdwg.mxu0
    %113 = vrot.lane.b32.xlu0 %v110, 120
    %v114 = vpop.permute.xlu0 %113
    %115 = vrot.lane.b32.xlu0 %v110, 112
    %v116 = vpop.permute.xlu0 %115
    %117 = vrot.lane.b32.xlu0 %v110, 104
    %v118 = vpop.permute.xlu0 %117
    %119 = vrot.lane.b32.xlu0 %v110, 96
    %v120 = vpop.permute.xlu0 %119
    %121 = vrot.lane.b32.xlu0 %v114, 96
    %v122 = vpop.permute.xlu0 %121
    %123 = vrot.lane.b32.xlu0 %v116, 96
    %v124 = vpop.permute.xlu0 %123
    %125 = vrot.lane.b32.xlu0 %v118, 96
    %v126 = vpop.permute.xlu0 %125
    %vm127 = vcmask 64512
    %v128 = vsel %vm127, %v110, 0
    %v130 = vsel %vm127, %v114, 0
    %v132 = vsel %vm127, %v116, 0
    %v134 = vsel %vm127, %v118, 0
    %v136 = vsel %vm127, %v120, 0
    %v138 = vsel %vm127, %v122, 0
    %v140 = vsel %vm127, %v124, 0
    %v142 = vsel %vm127, %v126, 0
    %144 = vmatpush.xpose.msra.mxu0 0.0
    %145 = vmatpush.xpose.msra.mxu0 0.0
    %146 = vmatpush.xpose.msra.mxu0 0.0
    %147 = vmatpush.xpose.msra.mxu0 0.0
    %148 = vmatpush.xpose.msra.mxu0 0.0
    %149 = vmatpush.xpose.msra.mxu0 0.0
    %150 = vmatpush.xpose.msra.mxu0 0.0
    %151 = vmatpush.xpose.msra.mxu0 0.0
    %152 = vmatpush.xpose.msra.mxu0 0.0
    %153 = vmatpush.xpose.msra.mxu0 0.0
    %154 = vmatpush.xpose.msra.mxu0 0.0
    %155 = vmatpush.xpose.msra.mxu0 0.0
    %156 = vmatpush.xpose.msra.mxu0 %v142
    %157 = vmatpush.xpose.msra.mxu0 %v140
    %158 = vmatpush.xpose.msra.mxu0 %v138
    %159 = vmatpush.xpose.msra.mxu0 %v136
    %160 = vmatmul.f32.gmra.mxu0 %v128
    %v161 = vpop.f32.mrf.mxu0
    %v162 = vadd.f32 0.0, %v161
    %163 = vmatmul.f32.gmra.mxu0 %v130
    %v164 = vpop.f32.mrf.mxu0
    %v165 = vadd.f32 0.0, %v164
    %166 = vmatmul.f32.gmra.mxu0 %v132
    %v167 = vpop.f32.mrf.mxu0
    %v168 = vadd.f32 0.0, %v167
    %169 = vmatmul.f32.gmra.mxu0 %v134
    %v170 = vpop.f32.mrf.mxu0
    %v171 = vadd.f32 0.0, %v170
    %172 = vdwg.mxu0
    %v173 = vsel %vm88, %v162, -inf
    %174 = vmax.xlane.f32.xlu0 %v173
    %v175 = vpop.xlane.xlu0 %174
    %v176 = vsel %vm88, %v165, -inf
    %177 = vmax.xlane.f32.xlu0 %v176
    %v178 = vpop.xlane.xlu0 %177
    %v179 = vsel %vm88, %v168, -inf
    %180 = vmax.xlane.f32.xlu0 %v179
    %v181 = vpop.xlane.xlu0 %180
    %v182 = vsel %vm88, %v171, -inf
    %183 = vmax.xlane.f32.xlu0 %v182
    %v184 = vpop.xlane.xlu0 %183
    %v185 = vsub.f32 %v162, %v175
    %v186 = vsub.f32 %v165, %v178
    %v187 = vsub.f32 %v168, %v181
    %v188 = vsub.f32 %v171, %v184
    %v189 = vmul.f32 %v185, 1.442695
    %v190 = vpow.pop %v189
    %v191 = vmul.f32 %v186, 1.442695
    %v192 = vpow.pop %v191
    %v193 = vmul.f32 %v187, 1.442695
    %v194 = vpow.pop %v193
    %v195 = vmul.f32 %v188, 1.442695
    %v196 = vpow.pop %v195
    %v197 = vsel %vm88, %v190, 0.0
    %198 = vadd.xlane.f32.xlu0 %v197
    %v199 = vpop.xlane.xlu0 %198
    %v200 = vsel %vm88, %v192, 0.0
    %201 = vadd.xlane.f32.xlu0 %v200
    %v202 = vpop.xlane.xlu0 %201
    %v203 = vsel %vm88, %v194, 0.0
    %204 = vadd.xlane.f32.xlu0 %v203
    %v205 = vpop.xlane.xlu0 %204
    %v206 = vsel %vm88, %v196, 0.0
    %207 = vadd.xlane.f32.xlu0 %v206
    %v208 = vpop.xlane.xlu0 %207
    %v209 = vrcp.pop %v199
    %v210 = vmul.f32 %v199, %v209
    %v211 = vsub.f32 1.0, %v210
    %v212 = vmul.f32 %v209, %v211
    %v213 = vadd.f32 %v209, %v212
    %vm214 = vweird.f32 %v199
    %vm215 = vweird.f32 %v209
    %vm216 = vmor %vm214, %vm215
    %v217 = vsel %vm216, %v209, %v213
    %v218 = vand.u32 2147483647, %v199
    %vm219 = vcmp.eq.f32.partialorder %v218, 8.507059e+37
    %v220 = vand.u32 %v199, 2147483648
    %v221 = vor.u32 1.1754944e-38, %v220
    %v222 = vsel %vm219, %v221, %v217
    %v223 = vmul.f32 %v190, %v222
    %v224 = vrcp.pop %v202
    %v225 = vmul.f32 %v202, %v224
    %v226 = vsub.f32 1.0, %v225
    %v227 = vmul.f32 %v224, %v226
    %v228 = vadd.f32 %v224, %v227
    %vm229 = vweird.f32 %v202
    %vm230 = vweird.f32 %v224
    %vm231 = vmor %vm229, %vm230
    %v232 = vsel %vm231, %v224, %v228
    %v233 = vand.u32 2147483647, %v202
    %vm234 = vcmp.eq.f32.partialorder %v233, 8.507059e+37
    %v235 = vand.u32 %v202, 2147483648
    %v236 = vor.u32 1.1754944e-38, %v235
    %v237 = vsel %vm234, %v236, %v232
    %v238 = vmul.f32 %v192, %v237
    %v239 = vrcp.pop %v205
    %v240 = vmul.f32 %v205, %v239
    %v241 = vsub.f32 1.0, %v240
    %v242 = vmul.f32 %v239, %v241
    %v243 = vadd.f32 %v239, %v242
    %vm244 = vweird.f32 %v205
    %vm245 = vweird.f32 %v239
    %vm246 = vmor %vm244, %vm245
    %v247 = vsel %vm246, %v239, %v243
    %v248 = vand.u32 2147483647, %v205
    %vm249 = vcmp.eq.f32.partialorder %v248, 8.507059e+37
    %v250 = vand.u32 %v205, 2147483648
    %v251 = vor.u32 1.1754944e-38, %v250
    %v252 = vsel %vm249, %v251, %v247
    %v253 = vmul.f32 %v194, %v252
    %v254 = vrcp.pop %v208
    %v255 = vmul.f32 %v208, %v254
    %v256 = vsub.f32 1.0, %v255
    %v257 = vmul.f32 %v254, %v256
    %v258 = vadd.f32 %v254, %v257
    %vm259 = vweird.f32 %v208
    %vm260 = vweird.f32 %v254
    %vm261 = vmor %vm259, %vm260
    %v262 = vsel %vm261, %v254, %v258
    %v263 = vand.u32 2147483647, %v208
    %vm264 = vcmp.eq.f32.partialorder %v263, 8.507059e+37
    %v265 = vand.u32 %v208, 2147483648
    %v266 = vor.u32 1.1754944e-38, %v265
    %v267 = vsel %vm264, %v266, %v262
    %v268 = vmul.f32 %v196, %v267
    %269 = vrot.lane.b32.xlu0 %v110, 64
    %v270 = vpop.permute.xlu0 %269
    %271 = vrot.lane.b32.xlu0 %v114, 64
    %v272 = vpop.permute.xlu0 %271
    %273 = vrot.lane.b32.xlu0 %v116, 64
    %v274 = vpop.permute.xlu0 %273
    %275 = vrot.lane.b32.xlu0 %v118, 64
    %v276 = vpop.permute.xlu0 %275
    %v282 = vsel %vm88, %v223, 0
    %v285 = vsel %vm88, %v238, 0
    %v288 = vsel %vm88, %v253, 0
    %v291 = vsel %vm88, %v268, 0
    %293 = vmatpush.msra.mxu0 0.0
    %294 = vmatpush.msra.mxu0 0.0
    %295 = vmatpush.msra.mxu0 0.0
    %296 = vmatpush.msra.mxu0 0.0
    %297 = vmatpush.msra.mxu0 0.0
    %298 = vmatpush.msra.mxu0 0.0
    %299 = vmatpush.msra.mxu0 0.0
    %300 = vmatpush.msra.mxu0 0.0
    %301 = vmatpush.msra.mxu0 0.0
    %302 = vmatpush.msra.mxu0 0.0
    %303 = vmatpush.msra.mxu0 0.0
    %304 = vmatpush.msra.mxu0 0.0
    %305 = vmatpush.msra.mxu0 %v276
    %306 = vmatpush.msra.mxu0 %v274
    %307 = vmatpush.msra.mxu0 %v272
    %308 = vmatpush.msra.mxu0 %v270
    %309 = vmatmul.f32.gmra.mxu0 %v282
    %v310 = vpop.f32.mrf.mxu0
    %v311 = vadd.f32 0.0, %v310
    %312 = vmatmul.f32.gmra.mxu0 %v285
    %v313 = vpop.f32.mrf.mxu0
    %v314 = vadd.f32 0.0, %v313
    %315 = vmatmul.f32.gmra.mxu0 %v288
    %v316 = vpop.f32.mrf.mxu0
    %v317 = vadd.f32 0.0, %v316
    %318 = vmatmul.f32.gmra.mxu0 %v291
    %v319 = vpop.f32.mrf.mxu0
    %v320 = vadd.f32 0.0, %v319
    %321 = vdwg.mxu0
    %323 = vrot.lane.b32.xlu0 %v314, 8
    %v324 = vpop.permute.xlu0 %323
    %327 = vrot.lane.b32.xlu0 %v317, 16
    %v328 = vpop.permute.xlu0 %327
    %331 = vrot.lane.b32.xlu0 %v320, 24
    %v332 = vpop.permute.xlu0 %331
    %v334 = vsel %vm127, %v311, %v324
    %vm335 = vcmask 130048
    %v336 = vsel %vm335, %v334, %v328
    %vm337 = vcmask 195584
    %v338 = vsel %vm337, %v336, %v332
    %v339 = vld [vmem:[#allocation7] sm:$0xff]
    %v340 = vld [vmem:[#allocation7 + $0x8] sm:$0xff]
    %v341 = vld [vmem:[#allocation7 + $0x10] sm:$0xff]
    %v342 = vld [vmem:[#allocation7 + $0x18] sm:$0xff]
    %v343 = vld [vmem:[%s4] sm:$0x1]
    %v345 = vperm.slane %v343, 0
    %v348 = vsel %vm88, %v338, 0
    %350 = vmatpush.msra.mxu0 0.0
    %351 = vmatpush.msra.mxu0 0.0
    %352 = vmatpush.msra.mxu0 0.0
    %353 = vmatpush.msra.mxu0 0.0
    %354 = vmatpush.msra.mxu0 0.0
    %355 = vmatpush.msra.mxu0 0.0
    %356 = vmatpush.msra.mxu0 0.0
    %357 = vmatpush.msra.mxu0 0.0
    %358 = vmatpush.msra.mxu0 0.0
    %359 = vmatpush.msra.mxu0 0.0
    %360 = vmatpush.msra.mxu0 0.0
    %361 = vmatpush.msra.mxu0 0.0
    %362 = vmatpush.msra.mxu0 %v342
    %363 = vmatpush.msra.mxu0 %v341
    %364 = vmatpush.msra.mxu0 %v340
    %365 = vmatpush.msra.mxu0 %v339
    %366 = vmatmul.f32.gmra.mxu0 %v348
    %v367 = vpop.f32.mrf.mxu0
    %v368 = vadd.f32 %v345, %v367
    %369 = vdwg.mxu0
    %vm370 = vcmask 392192
    %371 = vst.msk [vmem:[%s5] sm:$0xff] %vm370, %v368
    // Predicated region
    $region38: #{forward.1} parent=1 // pred_check
      _
    $region39: #{forward.1} parent=1 // pred_check_branch
      %373 = sbr.rel (0) target = $region41
    $region40: #{forward.1} parent=1 // pred_region
      _
    $region41: #{forward.1} parent=1 // pred_fallthru
      _
    // Predicated region
    $region42: #{forward.1} parent=1 // pred_check
      _
    $region43: #{forward.1} parent=1 // pred_check_branch
      %375 = sbr.rel (0) target = $region45
    $region44: #{forward.1} parent=1 // pred_region
      _
    $region45: #{forward.1} parent=1 // pred_fallthru
      _
    %376 = vsyncpa [#allocation3], 1
    %377 = vsyncpa [#allocation5], 1
    %378 = vsyncpa [#allocation8], 1

</llo_original>
